<compile_context>
chip_gen: v7x
topology: tpu7x:2x2x1
jax: 0.10.0
libtpu: 0.0.40
codegen_flags: <defaults>
</compile_context>

<pallas_src>
import jax
import jax.numpy as jnp
from jax.experimental import pallas as pl
from jax.experimental.pallas import tpu as pltpu

_IN = 4               # fc1 input features
_HID = 32             # fc1 output features
_LANE = 128           # TPU lane width; hidden dim is zero-padded to this
_P_ROWS = 8 + _LANE   # packed param slab rows: [w1(4) | b1 | b2 | pad(2) | w2(128)]


def _round_up(n, m):
    return (n + m - 1) // m * m


def _cdiv(a, b):
    return (a + b - 1) // b


def _device_kind():
    try:
        return jax.devices()[0].device_kind.lower()
    except Exception:
        return ""


def _make_kernel(out_dim, fc1_on_mxu):
    def _mlp_kernel(x_ref, p_ref, o_ref):
        x = x_ref[...]                       # (TM, 4)    f32
        p = p_ref[...]                       # (136, 128) f32, VMEM-resident params
        b1 = p[4:5, :]                       # (1, 128)  cols >= 32 are exactly 0
        b2 = p[5:6, :]                       # (1, 128)  cols >= out_dim are exactly 0
        if fc1_on_mxu:
            # v6e/v7x: fc2 (K=128,N=128) only half-fills the 256-wide MXU, so the
            # tiny K=4 fc1 matmul rides along nearly free and empties VPU/XLU slots.
            h = jnp.dot(x, p[0:_IN, :], preferred_element_type=jnp.float32) + b1
        else:
            # v5e: keep fc1 on the VPU (3 XLUs make the lane-splats cheap; the
            # small 4x128^2 MXU is already fully loaded by fc2).
            h = b1 + x[:, 0:1] * p[0:1, :]
            h = h + x[:, 1:2] * p[1:2, :]
            h = h + x[:, 2:3] * p[2:3, :]
            h = h + x[:, 3:4] * p[3:4, :]
        h = jnp.maximum(h, 0.0)              # (TM, 128); padded cols stay exactly 0
        # fc2 on the MXU; zero-padded rows/cols of w2 keep the result exact.
        w2 = p[8:, :]                        # (128, 128)
        out = jnp.dot(h, w2, preferred_element_type=jnp.float32) + b2
        # Narrow store: only the real out_dim columns ever reach HBM.
        o_ref[...] = out[:, :out_dim].astype(o_ref.dtype)

    return _mlp_kernel


def pack_params(w1, b1, w2, b2, *, torch_layout=False):
    """Pack fc1/fc2 weights+biases into one zero-padded (136, 128) f32 slab.

    Default expects math layout (y = x @ w): w1 (4, 32), b1 (32,), w2 (32, out_dim),
    b2 (out_dim,). Pass torch_layout=True for PyTorch nn.Linear storage
    (out_features, in_features), i.e. fc1.weight (32, 4) / fc2.weight (out_dim, 32);
    they are transposed internally.
    Rows 0:4 = w1, row 4 = b1, row 5 = b2, rows 8:40 = w2 (everything else zero).
    """
    w1 = jnp.asarray(w1, jnp.float32)
    w2 = jnp.asarray(w2, jnp.float32)
    if torch_layout:
        w1 = w1.T
        w2 = w2.T
    hid = w1.shape[1]
    out_dim = w2.shape[1]
    assert w1.shape[0] == _IN and hid == _HID and w2.shape[0] == _HID
    assert out_dim <= _LANE, "output width > 128 lanes not supported by this packing"
    p = jnp.zeros((_P_ROWS, _LANE), jnp.float32)
    p = p.at[0:_IN, 0:hid].set(w1)
    p = p.at[4, 0:hid].set(jnp.reshape(b1, (-1,)).astype(jnp.float32))
    p = p.at[5, 0:out_dim].set(jnp.reshape(b2, (-1,)).astype(jnp.float32))
    p = p.at[8:8 + hid, 0:out_dim].set(w2)
    return p


def shape_optimizer_forward(x, packed_params, out_dim, *, block_rows=4096,
                            fc1_on_mxu=None):
    """x: (B, 4) f32, packed_params from pack_params(); returns (B, out_dim) f32."""
    B = x.shape[0]
    kind = _device_kind()
    if fc1_on_mxu is None:
        fc1_on_mxu = "v5" not in kind                 # VPU fc1 only on v5e/v5p
    core_parallel = ("v7" in kind) or ("tpu7" in kind)

    # --- tiling: rows multiple of 8, minimal batch padding, even grid on v7x ---
    B8 = _round_up(B, 8)
    tm_cap = max(8, min(_round_up(block_rows, 8), B8))
    grid_n = _cdiv(B8, tm_cap)
    if core_parallel and B8 >= 16 and grid_n % 2 == 1:
        grid_n += 1                                   # let both TensorCores work
    TM = _round_up(_cdiv(B8, grid_n), 8)
    Bp = grid_n * TM                                  # padding waste < 8*grid_n rows
    if Bp != B:
        x = jnp.pad(x, ((0, Bp - B), (0, 0)))

    # VMEM working set (double-buffered): the (TM,4) x tile and the (TM,out_dim)
    # out tile are each lane-padded to 128 in VMEM -> 2 * 2 * TM*128*4 B
    # (~8 MiB at TM=4096) plus ~136 KiB of params; well inside the 32 MiB scoped
    # default on every generation (re-derive before pushing TM past ~8192 on v7x).
    cost = pl.CostEstimate(
        flops=2 * Bp * (_IN * _HID + _HID * out_dim),
        transcendentals=0,
        bytes_accessed=Bp * 4 * (_IN + out_dim) + _P_ROWS * _LANE * 4,
    )

    out = pl.pallas_call(
        _make_kernel(out_dim, fc1_on_mxu),
        out_shape=jax.ShapeDtypeStruct((Bp, out_dim), jnp.float32),
        grid_spec=pl.GridSpec(
            grid=(grid_n,),
            in_specs=[
                # x is streamed / double-buffered over the batch axis
                pl.BlockSpec((TM, _IN), lambda i: (i, 0)),
                # params: same block for every i -> DMA'd once, VMEM-resident
                pl.BlockSpec((_P_ROWS, _LANE), lambda i: (0, 0)),
            ],
            # narrow output: last block dim == full array dim (legal), so only
            # out_dim*4 bytes/row hit HBM and no wrapper column-slice is needed
            out_specs=pl.BlockSpec((TM, out_dim), lambda i: (i, 0)),
        ),
        compiler_params=pltpu.CompilerParams(
            dimension_semantics=(
                (pltpu.CORE_PARALLEL,) if core_parallel else (pltpu.PARALLEL,)),
        ),
        cost_estimate=cost,
    )(x, packed_params)
    return out if Bp == B else out[:B]


def init_params(key, num_shapes=6, max_block_size=8):
    """PyTorch nn.Linear-style init (uniform +-1/sqrt(fan_in)); (in, out) layout."""
    out_dim = num_shapes + max_block_size - 1
    k1, k2, k3, k4 = jax.random.split(key, 4)
    bound1 = 1.0 / jnp.sqrt(_IN)
    bound2 = 1.0 / jnp.sqrt(_HID)
    w1 = jax.random.uniform(k1, (_IN, _HID), jnp.float32, -bound1, bound1)
    b1 = jax.random.uniform(k2, (_HID,), jnp.float32, -bound1, bound1)
    w2 = jax.random.uniform(k3, (_HID, out_dim), jnp.float32, -bound2, bound2)
    b2 = jax.random.uniform(k4, (out_dim,), jnp.float32, -bound2, bound2)
    return w1, b1, w2, b2


def _reference(x, w1, b1, w2, b2):
    return jnp.maximum(x @ w1 + b1[None, :], 0.0) @ w2 + b2[None, :]


if __name__ == "__main__":
    key = jax.random.PRNGKey(0)
    kx, kx2, kp = jax.random.split(key, 3)

    num_shapes, max_block_size = 6, 8
    out_dim = num_shapes + max_block_size - 1    # 13

    w1, b1, w2, b2 = init_params(kp, num_shapes, max_block_size)
    params = pack_params(w1, b1, w2, b2)

    # small batch: single tile; exercise BOTH fc1 code paths (VPU and MXU)
    x = jax.random.normal(kx, (8, _IN), jnp.float32)
    ref = _reference(x, w1, b1, w2, b2)
    for on_mxu in (False, True):
        out = jax.block_until_ready(
            shape_optimizer_forward(x, params, out_dim, fc1_on_mxu=on_mxu))
        assert out.shape == (8, out_dim)
        assert jnp.allclose(out, ref, atol=2e-5, rtol=2e-5)

    # larger batch: exercises batch padding + multi-step parallel grid (auto fc1 path)
    x2 = jax.random.normal(kx2, (300, _IN), jnp.float32)
    out2 = jax.block_until_ready(
        shape_optimizer_forward(x2, params, out_dim, block_rows=128))
    ref2 = _reference(x2, w1, b1, w2, b2)
    assert out2.shape == (300, out_dim)
    assert jnp.allclose(out2, ref2, atol=2e-5, rtol=2e-5)

    print("KERNEL_OK")
</pallas_src>

<mosaic_0001>
module attributes {stable_mosaic.version = 11 : i64} {
  func.func @_mlp_kernel(%arg0: i32, %arg1: memref<8x4xf32, #tpu.memory_space<vmem>>, %arg2: memref<136x128xf32, #tpu.memory_space<vmem>>, %arg3: memref<8x13xf32, #tpu.memory_space<vmem>>) attributes {dimension_semantics = [#tpu.dimension_semantics<parallel>], iteration_bounds = array<i64: 1>, scalar_prefetch = 0 : i64, scratch_operands = 0 : i64, tpu.core_type = #tpu.core_type<tc>, window_params = [{transform_indices = @transform_0, window_bounds = array<i64: 8, 4>}, {pipeline_mode = #tpu.pipeline_mode<synchronous>, transform_indices = @transform_1, window_bounds = array<i64: 136, 128>}, {transform_indices = @transform_2, window_bounds = array<i64: 8, 13>}]} {
    %c0 = arith.constant 0 : index
    %c0_0 = arith.constant 0 : index
    %0 = vector.load %arg1[%c0, %c0_0] : memref<8x4xf32, #tpu.memory_space<vmem>>, vector<8x4xf32>
    %c0_1 = arith.constant 0 : index
    %c0_2 = arith.constant 0 : index
    %1 = vector.load %arg2[%c0_1, %c0_2] : memref<136x128xf32, #tpu.memory_space<vmem>>, vector<136x128xf32>
    %2 = vector.extract_strided_slice %1 {offsets = [4, 0], sizes = [1, 128], strides = [1, 1]} : vector<136x128xf32> to vector<1x128xf32>
    %3 = vector.extract_strided_slice %1 {offsets = [5, 0], sizes = [1, 128], strides = [1, 1]} : vector<136x128xf32> to vector<1x128xf32>
    %4 = vector.extract_strided_slice %0 {offsets = [0, 0], sizes = [8, 1], strides = [1, 1]} : vector<8x4xf32> to vector<8x1xf32>
    %5 = vector.extract_strided_slice %1 {offsets = [0, 0], sizes = [1, 128], strides = [1, 1]} : vector<136x128xf32> to vector<1x128xf32>
    %6 = vector.broadcast %4 : vector<8x1xf32> to vector<8x128xf32>
    %7 = vector.broadcast %5 : vector<1x128xf32> to vector<8x128xf32>
    %8 = arith.mulf %6, %7 : vector<8x128xf32>
    %9 = vector.broadcast %2 : vector<1x128xf32> to vector<8x128xf32>
    %10 = arith.addf %9, %8 : vector<8x128xf32>
    %11 = vector.extract_strided_slice %0 {offsets = [0, 1], sizes = [8, 1], strides = [1, 1]} : vector<8x4xf32> to vector<8x1xf32>
    %12 = vector.extract_strided_slice %1 {offsets = [1, 0], sizes = [1, 128], strides = [1, 1]} : vector<136x128xf32> to vector<1x128xf32>
    %13 = vector.broadcast %11 : vector<8x1xf32> to vector<8x128xf32>
    %14 = vector.broadcast %12 : vector<1x128xf32> to vector<8x128xf32>
    %15 = arith.mulf %13, %14 : vector<8x128xf32>
    %16 = arith.addf %10, %15 : vector<8x128xf32>
    %17 = vector.extract_strided_slice %0 {offsets = [0, 2], sizes = [8, 1], strides = [1, 1]} : vector<8x4xf32> to vector<8x1xf32>
    %18 = vector.extract_strided_slice %1 {offsets = [2, 0], sizes = [1, 128], strides = [1, 1]} : vector<136x128xf32> to vector<1x128xf32>
    %19 = vector.broadcast %17 : vector<8x1xf32> to vector<8x128xf32>
    %20 = vector.broadcast %18 : vector<1x128xf32> to vector<8x128xf32>
    %21 = arith.mulf %19, %20 : vector<8x128xf32>
    %22 = arith.addf %16, %21 : vector<8x128xf32>
    %23 = vector.extract_strided_slice %0 {offsets = [0, 3], sizes = [8, 1], strides = [1, 1]} : vector<8x4xf32> to vector<8x1xf32>
    %24 = vector.extract_strided_slice %1 {offsets = [3, 0], sizes = [1, 128], strides = [1, 1]} : vector<136x128xf32> to vector<1x128xf32>
    %25 = vector.broadcast %23 : vector<8x1xf32> to vector<8x128xf32>
    %26 = vector.broadcast %24 : vector<1x128xf32> to vector<8x128xf32>
    %27 = arith.mulf %25, %26 : vector<8x128xf32>
    %28 = arith.addf %22, %27 : vector<8x128xf32>
    %cst = arith.constant 0.000000e+00 : f32
    %29 = vector.broadcast %cst : f32 to vector<8x128xf32>
    %30 = arith.maximumf %28, %29 : vector<8x128xf32>
    %31 = vector.extract_strided_slice %1 {offsets = [8, 0], sizes = [128, 128], strides = [1, 1]} : vector<136x128xf32> to vector<128x128xf32>
    %cst_3 = arith.constant dense<0.000000e+00> : vector<8x128xf32>
    %32 = tpu.matmul %30, %31, %cst_3 {dimension_numbers = #tpu.dot_dimension_numbers<[1], [0], [0], [1], [0, 0, 1, 1], [], []>} : vector<8x128xf32>, vector<128x128xf32>, vector<8x128xf32> -> vector<8x128xf32>
    %33 = vector.broadcast %3 : vector<1x128xf32> to vector<8x128xf32>
    %34 = arith.addf %32, %33 : vector<8x128xf32>
    %35 = vector.extract_strided_slice %34 {offsets = [0, 0], sizes = [8, 13], strides = [1, 1]} : vector<8x128xf32> to vector<8x13xf32>
    %c0_4 = arith.constant 0 : index
    %c0_5 = arith.constant 0 : index
    %36 = vector.load %arg3[%c0_4, %c0_5] : memref<8x13xf32, #tpu.memory_space<vmem>>, vector<8x13xf32>
    tpu.vector_store %arg3[%c0_4, %c0_5], %35 {strides = array<i32>} : memref<8x13xf32, #tpu.memory_space<vmem>>, vector<8x13xf32>,
    return
  }
  func.func @transform_0(%arg0: i32) -> (i32, i32) {
    %c0_i32 = arith.constant 0 : i32
    %c0_i32_0 = arith.constant 0 : i32
    return %arg0, %c0_i32 : i32, i32
  }
  func.func @transform_1(%arg0: i32) -> (i32, i32) {
    %c0_i32 = arith.constant 0 : i32
    %c0_i32_0 = arith.constant 0 : i32
    %c0_i32_1 = arith.constant 0 : i32
    return %c0_i32, %c0_i32_0 : i32, i32
  }
  func.func @transform_2(%arg0: i32) -> (i32, i32) {
    %c0_i32 = arith.constant 0 : i32
    %c0_i32_0 = arith.constant 0 : i32
    return %arg0, %c0_i32 : i32, i32
  }
}

</mosaic_0001>

<llo_original>
// kernel: tpu_custom_call.1
$region0: #{tpu_custom_call.1}
  #allocation0 [shape = 'u32[]', space=smem, size = 0x4, offset = 0x4, fixed_abs, tag = 'smem constant byte address 0x4 - core index']
  #allocation1 [shape = 'u32[144,128]{1,0:T(1,128)}', space=vmem, size = 0x12000, scoped, tag = 'internal scratch']
  %s0 = inlined_call_operand.vmem [shape: f32[8,4], index: 0, kind: input, shape index: {}]
  %s1 = inlined_call_operand.hbm [shape: f32[136,128], index: 1, kind: input, shape index: {}]
  %s2 = inlined_call_operand.hbm [shape: f32[8,13], index: 2, kind: output, shape index: {}]
  %s3 = sld [smem:[#allocation0]]
  $region22: #{tpu_custom_call.1} parent=0
    _
  %s5 = ssub.s32 1, %s3
  %s6 = scalar_select 0, %s5, %s3
  $region1: #{tpu_custom_call.1} parent=0
    #allocation2 [shape = 'u8[69632]{0}', space=vmem, size = 0x11000, scoped, tag = 'input window, operand 1, single buffered']
    #allocation3 [shape = 's32[1]{0}', space=sflag, size = 0x4, scoped, tag = 'scoped memory for tpu_custom_call.1']
    #allocation4 [shape = 's32[1]{0}', space=sflag, size = 0x4, scoped, tag = 'scoped memory for tpu_custom_call.1']
    #allocation5 [shape = 'u8[4096]{0}', space=vmem, size = 0x1000, scoped, tag = 'output window, operand 0, single buffered']
    %7 = vsyncpa [#allocation3], 0
    %8 = vsyncpa [#allocation4], 0
    // Predicated region
    $region2: #{tpu_custom_call.1} parent=1 // pred_check
      _
    $region3: #{tpu_custom_call.1} parent=1 // pred_check_branch
      %10 = sbr.rel (0) target = $region5
    $region4: #{tpu_custom_call.1} parent=1 // pred_region
      _
    $region5: #{tpu_custom_call.1} parent=1 // pred_fallthru
      _
    // Predicated region
    $region6: #{tpu_custom_call.1} parent=1 // pred_check
      _
    $region7: #{tpu_custom_call.1} parent=1 // pred_check_branch
      %12 = sbr.rel (0) target = $region9
    $region8: #{tpu_custom_call.1} parent=1 // pred_region
      %s14 = ssub.s32 2176, 2176
      %15 = vsyncadd [#allocation3], %s14
      %s16 = sshll.u32 [#allocation2], 4
      %s17 = int_to_ptr.vmem [resolvable:$true] %s16
      %22 = dma.hbm_to_vmem [thread:$0]  %s1, 2176, %s17, [#allocation3], 128, 128, 8
    $region9: #{tpu_custom_call.1} parent=1 // pred_fallthru
      _
    // Predicated region
    $region10: #{tpu_custom_call.1} parent=1 // pred_check
      _
    $region11: #{tpu_custom_call.1} parent=1 // pred_check_branch
      %24 = sbr.rel (0) target = $region13
    $region12: #{tpu_custom_call.1} parent=1 // pred_region
      %25 = dma.done [#allocation3], 2176
    $region13: #{tpu_custom_call.1} parent=1 // pred_fallthru
      _
    %v26 = vld [vmem:[%s0] sm:$0xff]
    %v27 = vld [vmem:[#allocation2] sm:$0xff]
    %v28 = vld [vmem:[#allocation2 + $0x8] sm:$0xff]
    %v29 = vld [vmem:[#allocation2 + $0x10] sm:$0xff]
    %v30 = vld [vmem:[#allocation2 + $0x18] sm:$0xff]
    %v31 = vld [vmem:[#allocation2 + $0x20] sm:$0xff]
    %v32 = vld [vmem:[#allocation2 + $0x28] sm:$0xff]
    %v33 = vld [vmem:[#allocation2 + $0x30] sm:$0xff]
    %v34 = vld [vmem:[#allocation2 + $0x38] sm:$0xff]
    %v35 = vld [vmem:[#allocation2 + $0x40] sm:$0xff]
    %v36 = vld [vmem:[#allocation2 + $0x48] sm:$0xff]
    %v37 = vld [vmem:[#allocation2 + $0x50] sm:$0xff]
    %v38 = vld [vmem:[#allocation2 + $0x58] sm:$0xff]
    %v39 = vld [vmem:[#allocation2 + $0x60] sm:$0xff]
    %v40 = vld [vmem:[#allocation2 + $0x68] sm:$0xff]
    %v41 = vld [vmem:[#allocation2 + $0x70] sm:$0xff]
    %v42 = vld [vmem:[#allocation2 + $0x78] sm:$0xff]
    %v43 = vld [vmem:[#allocation2 + $0x80] sm:$0xff]
    %45 = vset.pattern.permute.xlu0 0
    %46 = vperm.xlu0 %45, %v26
    %v47 = vpop.permute.xlu0 %46
    %v49 = vlaneseq
    %v50 = vshrl.u32 %v49, 7
    %v51 = vsub.s32 0, %v50
    %v52 = vrot.slane %v27, %v51
    %v53 = vmul.f32 %v47, %v52
    %v54 = vlaneseq
    %v55 = vshrl.u32 %v54, 7
    %v56 = vsub.s32 4, %v55
    %v57 = vrot.slane %v27, %v56
    %v58 = vadd.f32 %v57, %v53
    %59 = vset.pattern.permute.xlu0 1
    %60 = vperm.xlu0 %59, %v26
    %v61 = vpop.permute.xlu0 %60
    %v63 = vlaneseq
    %v64 = vshrl.u32 %v63, 7
    %v65 = vsub.s32 1, %v64
    %v66 = vrot.slane %v27, %v65
    %v67 = vmul.f32 %v61, %v66
    %v68 = vadd.f32 %v58, %v67
    %69 = vset.pattern.permute.xlu0 2
    %70 = vperm.xlu0 %69, %v26
    %v71 = vpop.permute.xlu0 %70
    %v73 = vlaneseq
    %v74 = vshrl.u32 %v73, 7
    %v75 = vsub.s32 2, %v74
    %v76 = vrot.slane %v27, %v75
    %v77 = vmul.f32 %v71, %v76
    %v78 = vadd.f32 %v68, %v77
    %79 = vset.pattern.permute.xlu0 3
    %80 = vperm.xlu0 %79, %v26
    %v81 = vpop.permute.xlu0 %80
    %v83 = vlaneseq
    %v84 = vshrl.u32 %v83, 7
    %v85 = vsub.s32 3, %v84
    %v86 = vrot.slane %v27, %v85
    %v87 = vmul.f32 %v81, %v86
    %v88 = vadd.f32 %v78, %v87
    %v89 = vmax.f32 %v88, 0.0
    %v90 = vlaneseq
    %v91 = vshrl.u32 %v90, 7
    %v92 = vsub.s32 5, %v91
    %v93 = vrot.slane %v27, %v92
    %94 = vmatprep.subr.mxu0 0.0
    %95 = vmatpush1.msra.mxu0 %v28
    %96 = vmatprep.subr.mxu0 0.0
    %97 = vmatpush1.msra.mxu0 %v29
    %98 = vmatprep.subr.mxu0 0.0
    %99 = vmatpush1.msra.mxu0 %v30
    %100 = vmatprep.subr.mxu0 0.0
    %101 = vmatpush1.msra.mxu0 %v31
    %102 = vmatprep.subr.mxu0 0.0
    %103 = vmatpush1.msra.mxu0 %v32
    %104 = vmatprep.subr.mxu0 0.0
    %105 = vmatpush1.msra.mxu0 %v33
    %106 = vmatprep.subr.mxu0 0.0
    %107 = vmatpush1.msra.mxu0 %v34
    %108 = vmatprep.subr.mxu0 0.0
    %109 = vmatpush1.msra.mxu0 %v35
    %110 = vmatprep.subr.mxu0 0.0
    %111 = vmatpush1.msra.mxu0 %v36
    %112 = vmatprep.subr.mxu0 0.0
    %113 = vmatpush1.msra.mxu0 %v37
    %114 = vmatprep.subr.mxu0 0.0
    %115 = vmatpush1.msra.mxu0 %v38
    %116 = vmatprep.subr.mxu0 0.0
    %117 = vmatpush1.msra.mxu0 %v39
    %118 = vmatprep.subr.mxu0 0.0
    %119 = vmatpush1.msra.mxu0 %v40
    %120 = vmatprep.subr.mxu0 0.0
    %121 = vmatpush1.msra.mxu0 %v41
    %122 = vmatprep.subr.mxu0 0.0
    %123 = vmatpush1.msra.mxu0 %v42
    %124 = vmatprep.subr.mxu0 0.0
    %125 = vmatpush1.msra.mxu0 %v43
    %126 = vmatprep.subr.mxu0 0.0
    %127 = vmatpush1.msra.mxu0 0.0
    %128 = vmatprep.subr.mxu0 0.0
    %129 = vmatpush1.msra.mxu0 0.0
    %130 = vmatprep.subr.mxu0 0.0
    %131 = vmatpush1.msra.mxu0 0.0
    %132 = vmatprep.subr.mxu0 0.0
    %133 = vmatpush1.msra.mxu0 0.0
    %134 = vmatprep.subr.mxu0 0.0
    %135 = vmatpush1.msra.mxu0 0.0
    %136 = vmatprep.subr.mxu0 0.0
    %137 = vmatpush1.msra.mxu0 0.0
    %138 = vmatprep.subr.mxu0 0.0
    %139 = vmatpush1.msra.mxu0 0.0
    %140 = vmatprep.subr.mxu0 0.0
    %141 = vmatpush1.msra.mxu0 0.0
    %142 = vmatprep.subr.mxu0 0.0
    %143 = vmatpush1.msra.mxu0 0.0
    %144 = vmatprep.subr.mxu0 0.0
    %145 = vmatpush1.msra.mxu0 0.0
    %146 = vmatprep.subr.mxu0 0.0
    %147 = vmatpush1.msra.mxu0 0.0
    %148 = vmatprep.subr.mxu0 0.0
    %149 = vmatpush1.msra.mxu0 0.0
    %150 = vmatprep.subr.mxu0 0.0
    %151 = vmatpush1.msra.mxu0 0.0
    %152 = vmatprep.subr.mxu0 0.0
    %153 = vmatpush1.msra.mxu0 0.0
    %154 = vmatprep.subr.mxu0 0.0
    %155 = vmatpush1.msra.mxu0 0.0
    %156 = vmatprep.subr.mxu0 0.0
    %157 = vmatpush1.msra.mxu0 0.0
    %158 = vmatprep.mubr.f32.mxu0 0.0
    %159 = vmatmul.mubr.f32.gmra.mrb[0].mxu0 %v89
    %v160 = vpop.f32.mrb[0].mxu0
    %v161 = vadd.f32 %v93, %v160
    %v162 = vpop.f32.mrb[0].mxu0
    %163 = vdwg.mxu0
    %vm164 = vcmask 105472
    %165 = vst.msk [vmem:[#allocation5] sm:$0xff] %vm164, %v161
    // Predicated region
    $region14: #{tpu_custom_call.1} parent=1 // pred_check
      _
    $region15: #{tpu_custom_call.1} parent=1 // pred_check_branch
      %167 = sbr.rel (0) target = $region17
    $region16: #{tpu_custom_call.1} parent=1 // pred_region
      %s169 = ssub.s32 128, 128
      %170 = vsyncadd [#allocation4], %s169
      %s172 = sshll.u32 [#allocation5], 4
      %s173 = int_to_ptr.vmem [resolvable:$true] %s172
      %175 = dma.vmem_to_hbm [thread:$0]  %s173, 128, %s2, [#allocation4]
    $region17: #{tpu_custom_call.1} parent=1 // pred_fallthru
      _
    // Predicated region
    $region18: #{tpu_custom_call.1} parent=1 // pred_check
      _
    $region19: #{tpu_custom_call.1} parent=1 // pred_check_branch
      %177 = sbr.rel (0) target = $region21
    $region20: #{tpu_custom_call.1} parent=1 // pred_region
      %178 = dma.done [#allocation4], 128
    $region21: #{tpu_custom_call.1} parent=1 // pred_fallthru
      _
    %179 = vsyncpa [#allocation3], 1
    %180 = vsyncpa [#allocation4], 1

</llo_original>
